<compile_context>
chip_gen: v7x
topology: tpu7x:2x2x1
jax: 0.10.0
libtpu: 0.0.40
codegen_flags: <defaults>
</compile_context>

<pallas_src>
import functools

import jax
import jax.numpy as jnp
import numpy as np
from jax.experimental import pallas as pl
from jax.experimental.pallas import tpu as pltpu


def _residual_block_kernel(x_ref, w_ref, b_ref, res_ref, skip_ref, xpad_scr, *,
                           conv_pad, dilation, kernel_size, c_in, c_pad, t_in,
                           l_pad, t_scratch, b_blk, dtype):
    """One batch block (b_blk elements) per grid step.

    x_ref    : (b_blk, C_in, T)          raw (unpadded) input block
    w_ref    : (K, 2*C_pad, C_pad)       fused dilated+gate weights, tap-major
    b_ref    : (2*C_pad, 1)              fused biases
    res_ref  : (b_blk, C_pad, L_pad)
    skip_ref : (b_blk, C_pad, L_pad)
    xpad_scr : (C_pad, L_pad + (K-1)*d)  zero-padded receptive field scratch
    """
    # Zero only the regions the matmul taps read but the per-element x copy
    # does not overwrite (left/right halo strips + channel-pad rows).  This is
    # a tiny store pass (vs. zeroing the whole scratch) and is re-done every
    # step, so correctness does not depend on grid-axis core splitting.
    if conv_pad > 0:
        xpad_scr[:, :conv_pad] = jnp.zeros((c_pad, conv_pad), dtype)
    tail = t_scratch - conv_pad - t_in
    if tail > 0:
        xpad_scr[:, conv_pad + t_in:] = jnp.zeros((c_pad, tail), dtype)
    if c_pad > c_in:
        xpad_scr[c_in:, conv_pad:conv_pad + t_in] = jnp.zeros(
            (c_pad - c_in, t_in), dtype)

    # Residual slice x[:, :, -L_out:] starts here inside the padded scratch.
    res_start = (kernel_size - 1) * dilation - conv_pad

    for j in range(b_blk):  # static unroll: amortizes per-grid-step overhead
        # x read from HBM once per element; padded receptive field built in VMEM.
        xpad_scr[:c_in, conv_pad:conv_pad + t_in] = x_ref[j]

        # K accumulating MXU matmuls; no im2col buffer is ever materialized.
        acc = jnp.dot(w_ref[0], xpad_scr[:, 0:l_pad],
                      preferred_element_type=jnp.float32)
        for k in range(1, kernel_size):
            acc = acc + jnp.dot(
                w_ref[k], xpad_scr[:, k * dilation:k * dilation + l_pad],
                preferred_element_type=jnp.float32)
        acc = acc + b_ref[...].astype(jnp.float32)          # (2*C_pad, L_pad)

        # Sublane-aligned split (c_pad % 8 == 0): free slice, no retile.
        gated = acc[:c_pad] * jax.nn.sigmoid(acc[c_pad:])   # (C_pad, L_pad)
        skip_ref[j] = gated.astype(skip_ref.dtype)

        x_res = xpad_scr[:, res_start:res_start + l_pad].astype(jnp.float32)
        res_ref[j] = (x_res + gated).astype(res_ref.dtype)


def _pick_batch_block(n, per_elem_bytes, budget_bytes=8 << 20, max_blk=8):
    """Largest divisor of n (<= max_blk) whose per-step buffers fit the budget."""
    best = 1
    for b in range(1, min(n, max_blk) + 1):
        if n % b == 0 and b * per_elem_bytes <= budget_bytes:
            best = b
    return best


def residual_block(x, w_dilated, b_dilated, w_gate, b_gate, *, kernel_size,
                   dilation, padding):
    """Pallas wrapper reproducing ResidualBlock.forward. x: (N, C_in, T)."""
    n, c_in, t = x.shape
    c_out = w_dilated.shape[0]
    assert c_in == c_out, "residual add requires in_filters == out_filters"
    conv_pad = (kernel_size - 1) * dilation // 2 + padding // 2
    l_out = t + 2 * conv_pad - dilation * (kernel_size - 1)
    assert 0 < l_out <= t, "res = x[:, :, -L_out:] + gated requires 0 < L_out <= T"

    lane, sub = 128, 8
    l_pad = ((l_out + lane - 1) // lane) * lane            # lane-dense outputs
    c_pad = ((c_out + sub - 1) // sub) * sub               # sublane-aligned split
    t_scratch = l_pad + (kernel_size - 1) * dilation       # padded receptive field

    # Wrapper-side layout plumbing (free): pad channels to a sublane multiple,
    # fuse the two convs along the output-channel axis, and put the tap index
    # first so the kernel never slices the weight lane axis.
    def pad_w(w):
        return jnp.pad(w, ((0, c_pad - c_out), (0, c_pad - c_in), (0, 0)))

    w_k = jnp.transpose(
        jnp.concatenate([pad_w(w_dilated), pad_w(w_gate)], axis=0),
        (2, 0, 1))                                          # (K, 2*C_pad, C_pad)
    b_cat = jnp.concatenate(
        [jnp.pad(b_dilated, (0, c_pad - c_out)),
         jnp.pad(b_gate, (0, c_pad - c_out))]).reshape(2 * c_pad, 1)

    itemsize = jnp.dtype(x.dtype).itemsize
    # Double-buffered x block + two double-buffered output blocks per element.
    per_elem = (2 * c_in * t + 4 * c_pad * l_pad) * itemsize
    b_blk = _pick_batch_block(n, per_elem)

    kernel = functools.partial(
        _residual_block_kernel,
        conv_pad=conv_pad, dilation=dilation, kernel_size=kernel_size,
        c_in=c_in, c_pad=c_pad, t_in=t, l_pad=l_pad, t_scratch=t_scratch,
        b_blk=b_blk, dtype=x.dtype)

    vmem_need = (b_blk * per_elem
                 + 2 * (w_k.size + b_cat.size) * itemsize   # resident W/b (dbl-buf)
                 + c_pad * t_scratch * itemsize)             # scratch
    # Cap at 56 MiB: leaves headroom on v7x's 64 MiB per-TC VMEM.
    vmem_limit = int(min(max(2 * vmem_need, 16 << 20), 56 << 20))

    res_p, skip_p = pl.pallas_call(
        kernel,
        out_shape=(jax.ShapeDtypeStruct((n, c_pad, l_pad), x.dtype),
                   jax.ShapeDtypeStruct((n, c_pad, l_pad), x.dtype)),
        grid=(n // b_blk,),
        in_specs=[
            pl.BlockSpec((b_blk, c_in, t), lambda i: (i, 0, 0)),                 # x
            pl.BlockSpec((kernel_size, 2 * c_pad, c_pad), lambda i: (0, 0, 0)),  # W (resident)
            pl.BlockSpec((2 * c_pad, 1), lambda i: (0, 0)),                      # b (resident)
        ],
        out_specs=(
            pl.BlockSpec((b_blk, c_pad, l_pad), lambda i: (i, 0, 0)),
            pl.BlockSpec((b_blk, c_pad, l_pad), lambda i: (i, 0, 0)),
        ),
        scratch_shapes=[pltpu.VMEM((c_pad, t_scratch), x.dtype)],
        compiler_params=pltpu.CompilerParams(
            dimension_semantics=("parallel",),
            vmem_limit_bytes=vmem_limit),
    )(x, w_k, b_cat)

    return res_p[:, :c_out, :l_out], skip_p[:, :c_out, :l_out]


def _reference(x, w_dilated, b_dilated, w_gate, b_gate, *, kernel_size, dilation,
               padding):
    """Pure-JAX reference (lax.conv_general_dilated) for validation."""
    conv_pad = (kernel_size - 1) * dilation // 2 + padding // 2

    def conv1d(x, w, b):
        y = jax.lax.conv_general_dilated(
            x, w, window_strides=(1,), padding=[(conv_pad, conv_pad)],
            rhs_dilation=(dilation,), dimension_numbers=('NCW', 'OIW', 'NCW'))
        return y + b[None, :, None]

    cd = conv1d(x, w_dilated, b_dilated)
    cg = conv1d(x, w_gate, b_gate)
    gated = cd * jax.nn.sigmoid(cg)
    out_len = gated.shape[2]
    res = x[:, :, x.shape[2] - out_len:] + gated
    return res, gated


if __name__ == "__main__":
    # Small shapes consistent with the module: in_filters == out_filters so the
    # residual add is well defined; padding chosen so L_out <= T.
    N, C, T = 2, 4, 16
    kernel_size, dilation, padding = 3, 2, 0

    key = jax.random.PRNGKey(0)
    k1, k2, k3, k4, k5 = jax.random.split(key, 5)
    fan_in = C * kernel_size
    bound = 1.0 / np.sqrt(fan_in)
    x = jax.random.normal(k1, (N, C, T), dtype=jnp.float32)
    w_dilated = jax.random.uniform(k2, (C, C, kernel_size), jnp.float32, -bound, bound)
    b_dilated = jax.random.uniform(k3, (C,), jnp.float32, -bound, bound)
    w_gate = jax.random.uniform(k4, (C, C, kernel_size), jnp.float32, -bound, bound)
    b_gate = jax.random.uniform(k5, (C,), jnp.float32, -bound, bound)

    res, skip = residual_block(x, w_dilated, b_dilated, w_gate, b_gate,
                               kernel_size=kernel_size, dilation=dilation,
                               padding=padding)
    jax.block_until_ready((res, skip))

    res_ref, skip_ref = _reference(x, w_dilated, b_dilated, w_gate, b_gate,
                                   kernel_size=kernel_size, dilation=dilation,
                                   padding=padding)
    assert res.shape == res_ref.shape and skip.shape == skip_ref.shape
    np.testing.assert_allclose(np.asarray(res), np.asarray(res_ref),
                               rtol=1e-5, atol=1e-5)
    np.testing.assert_allclose(np.asarray(skip), np.asarray(skip_ref),
                               rtol=1e-5, atol=1e-5)
    print("KERNEL_OK")
</pallas_src>

<mosaic_0001>
module attributes {stable_mosaic.version = 11 : i64} {
  func.func @_residual_block_kernel(%arg0: i32, %arg1: memref<2x4x16xf32, #tpu.memory_space<vmem>>, %arg2: memref<3x16x8xf32, #tpu.memory_space<vmem>>, %arg3: memref<16x1xf32, #tpu.memory_space<vmem>>, %arg4: memref<2x8x128xf32, #tpu.memory_space<vmem>>, %arg5: memref<2x8x128xf32, #tpu.memory_space<vmem>>, %arg6: memref<8x132xf32, #tpu.memory_space<vmem>>) attributes {dimension_semantics = [#tpu.dimension_semantics<parallel>], iteration_bounds = array<i64: 1>, scalar_prefetch = 0 : i64, scratch_operands = 1 : i64, tpu.core_type = #tpu.core_type<tc>, window_params = [{transform_indices = @transform_0, window_bounds = array<i64: 2, 4, 16>}, {pipeline_mode = #tpu.pipeline_mode<synchronous>, transform_indices = @transform_1, window_bounds = array<i64: 3, 16, 8>}, {pipeline_mode = #tpu.pipeline_mode<synchronous>, transform_indices = @transform_2, window_bounds = array<i64: 16, 1>}, {transform_indices = @transform_3, window_bounds = array<i64: 2, 8, 128>}, {transform_indices = @transform_4, window_bounds = array<i64: 2, 8, 128>}]} {
    %cst = arith.constant 0.000000e+00 : f32
    %0 = vector.broadcast %cst : f32 to vector<8x2xf32>
    %c0 = arith.constant 0 : index
    %c0_0 = arith.constant 0 : index
    %1 = vector.load %arg6[%c0, %c0_0] : memref<8x132xf32, #tpu.memory_space<vmem>>, vector<8x2xf32>
    tpu.vector_store %arg6[%c0, %c0_0], %0 {strides = array<i32>} : memref<8x132xf32, #tpu.memory_space<vmem>>, vector<8x2xf32>,
    %cst_1 = arith.constant 0.000000e+00 : f32
    %2 = vector.broadcast %cst_1 : f32 to vector<8x114xf32>
    %c0_2 = arith.constant 0 : index
    %c18 = arith.constant 18 : index
    %3 = vector.load %arg6[%c0_2, %c18] : memref<8x132xf32, #tpu.memory_space<vmem>>, vector<8x114xf32>
    tpu.vector_store %arg6[%c0_2, %c18], %2 {strides = array<i32>} : memref<8x132xf32, #tpu.memory_space<vmem>>, vector<8x114xf32>,
    %cst_3 = arith.constant 0.000000e+00 : f32
    %4 = vector.broadcast %cst_3 : f32 to vector<4x16xf32>
    %c4 = arith.constant 4 : index
    %c2 = arith.constant 2 : index
    %5 = vector.load %arg6[%c4, %c2] : memref<8x132xf32, #tpu.memory_space<vmem>>, vector<4x16xf32>
    tpu.vector_store %arg6[%c4, %c2], %4 {strides = array<i32>} : memref<8x132xf32, #tpu.memory_space<vmem>>, vector<4x16xf32>,
    %c0_4 = arith.constant 0 : index
    %c0_5 = arith.constant 0 : index
    %c0_6 = arith.constant 0 : index
    %6 = vector.load %arg1[%c0_4, %c0_5, %c0_6] : memref<2x4x16xf32, #tpu.memory_space<vmem>>, vector<1x4x16xf32>
    %7 = vector.shape_cast %6 : vector<1x4x16xf32> to vector<4x16xf32>
    %c0_7 = arith.constant 0 : index
    %c2_8 = arith.constant 2 : index
    %8 = vector.load %arg6[%c0_7, %c2_8] : memref<8x132xf32, #tpu.memory_space<vmem>>, vector<4x16xf32>
    tpu.vector_store %arg6[%c0_7, %c2_8], %7 {strides = array<i32>} : memref<8x132xf32, #tpu.memory_space<vmem>>, vector<4x16xf32>,
    %c0_9 = arith.constant 0 : index
    %c0_10 = arith.constant 0 : index
    %c0_11 = arith.constant 0 : index
    %9 = vector.load %arg2[%c0_9, %c0_10, %c0_11] : memref<3x16x8xf32, #tpu.memory_space<vmem>>, vector<1x16x8xf32>
    %10 = vector.shape_cast %9 : vector<1x16x8xf32> to vector<16x8xf32>
    %c0_12 = arith.constant 0 : index
    %c0_13 = arith.constant 0 : index
    %11 = vector.load %arg6[%c0_12, %c0_13] : memref<8x132xf32, #tpu.memory_space<vmem>>, vector<8x128xf32>
    %cst_14 = arith.constant dense<0.000000e+00> : vector<16x128xf32>
    %12 = tpu.matmul %10, %11, %cst_14 {dimension_numbers = #tpu.dot_dimension_numbers<[1], [0], [0], [1], [0, 0, 1, 1], [], []>} : vector<16x8xf32>, vector<8x128xf32>, vector<16x128xf32> -> vector<16x128xf32>
    %c1 = arith.constant 1 : index
    %c0_15 = arith.constant 0 : index
    %c0_16 = arith.constant 0 : index
    %13 = vector.load %arg2[%c1, %c0_15, %c0_16] : memref<3x16x8xf32, #tpu.memory_space<vmem>>, vector<1x16x8xf32>
    %14 = vector.shape_cast %13 : vector<1x16x8xf32> to vector<16x8xf32>
    %c0_17 = arith.constant 0 : index
    %c2_18 = arith.constant 2 : index
    %15 = vector.load %arg6[%c0_17, %c2_18] : memref<8x132xf32, #tpu.memory_space<vmem>>, vector<8x128xf32>
    %cst_19 = arith.constant dense<0.000000e+00> : vector<16x128xf32>
    %16 = tpu.matmul %14, %15, %cst_19 {dimension_numbers = #tpu.dot_dimension_numbers<[1], [0], [0], [1], [0, 0, 1, 1], [], []>} : vector<16x8xf32>, vector<8x128xf32>, vector<16x128xf32> -> vector<16x128xf32>
    %17 = arith.addf %12, %16 : vector<16x128xf32>
    %c2_20 = arith.constant 2 : index
    %c0_21 = arith.constant 0 : index
    %c0_22 = arith.constant 0 : index
    %18 = vector.load %arg2[%c2_20, %c0_21, %c0_22] : memref<3x16x8xf32, #tpu.memory_space<vmem>>, vector<1x16x8xf32>
    %19 = vector.shape_cast %18 : vector<1x16x8xf32> to vector<16x8xf32>
    %c0_23 = arith.constant 0 : index
    %c4_24 = arith.constant 4 : index
    %20 = vector.load %arg6[%c0_23, %c4_24] : memref<8x132xf32, #tpu.memory_space<vmem>>, vector<8x128xf32>
    %cst_25 = arith.constant dense<0.000000e+00> : vector<16x128xf32>
    %21 = tpu.matmul %19, %20, %cst_25 {dimension_numbers = #tpu.dot_dimension_numbers<[1], [0], [0], [1], [0, 0, 1, 1], [], []>} : vector<16x8xf32>, vector<8x128xf32>, vector<16x128xf32> -> vector<16x128xf32>
    %22 = arith.addf %17, %21 : vector<16x128xf32>
    %c0_26 = arith.constant 0 : index
    %c0_27 = arith.constant 0 : index
    %23 = vector.load %arg3[%c0_26, %c0_27] : memref<16x1xf32, #tpu.memory_space<vmem>>, vector<16x1xf32>
    %24 = vector.broadcast %23 : vector<16x1xf32> to vector<16x128xf32>
    %25 = arith.addf %22, %24 : vector<16x128xf32>
    %26 = vector.extract_strided_slice %25 {offsets = [0, 0], sizes = [8, 128], strides = [1, 1]} : vector<16x128xf32> to vector<8x128xf32>
    %27 = vector.extract_strided_slice %25 {offsets = [8, 0], sizes = [8, 128], strides = [1, 1]} : vector<16x128xf32> to vector<8x128xf32>
    %28 = arith.negf %27 : vector<8x128xf32>
    %29 = math.exp %28 : vector<8x128xf32>
    %cst_28 = arith.constant 1.000000e+00 : f32
    %30 = vector.broadcast %cst_28 : f32 to vector<8x128xf32>
    %31 = arith.addf %30, %29 : vector<8x128xf32>
    %32 = arith.divf %30, %31 : vector<8x128xf32>
    %33 = arith.mulf %26, %32 : vector<8x128xf32>
    %c0_29 = arith.constant 0 : index
    %c0_30 = arith.constant 0 : index
    %c0_31 = arith.constant 0 : index
    %34 = vector.load %arg5[%c0_29, %c0_30, %c0_31] : memref<2x8x128xf32, #tpu.memory_space<vmem>>, vector<1x8x128xf32>
    %35 = vector.shape_cast %34 : vector<1x8x128xf32> to vector<8x128xf32>
    %36 = vector.shape_cast %33 : vector<8x128xf32> to vector<1x8x128xf32>
    tpu.vector_store %arg5[%c0_29, %c0_30, %c0_31], %36 {strides = array<i32>} : memref<2x8x128xf32, #tpu.memory_space<vmem>>, vector<1x8x128xf32>,
    %c0_32 = arith.constant 0 : index
    %c2_33 = arith.constant 2 : index
    %37 = vector.load %arg6[%c0_32, %c2_33] : memref<8x132xf32, #tpu.memory_space<vmem>>, vector<8x128xf32>
    %38 = arith.addf %37, %33 : vector<8x128xf32>
    %c0_34 = arith.constant 0 : index
    %c0_35 = arith.constant 0 : index
    %c0_36 = arith.constant 0 : index
    %39 = vector.load %arg4[%c0_34, %c0_35, %c0_36] : memref<2x8x128xf32, #tpu.memory_space<vmem>>, vector<1x8x128xf32>
    %40 = vector.shape_cast %39 : vector<1x8x128xf32> to vector<8x128xf32>
    %41 = vector.shape_cast %38 : vector<8x128xf32> to vector<1x8x128xf32>
    tpu.vector_store %arg4[%c0_34, %c0_35, %c0_36], %41 {strides = array<i32>} : memref<2x8x128xf32, #tpu.memory_space<vmem>>, vector<1x8x128xf32>,
    %c1_37 = arith.constant 1 : index
    %c0_38 = arith.constant 0 : index
    %c0_39 = arith.constant 0 : index
    %42 = vector.load %arg1[%c1_37, %c0_38, %c0_39] : memref<2x4x16xf32, #tpu.memory_space<vmem>>, vector<1x4x16xf32>
    %43 = vector.shape_cast %42 : vector<1x4x16xf32> to vector<4x16xf32>
    %c0_40 = arith.constant 0 : index
    %c2_41 = arith.constant 2 : index
    %44 = vector.load %arg6[%c0_40, %c2_41] : memref<8x132xf32, #tpu.memory_space<vmem>>, vector<4x16xf32>
    tpu.vector_store %arg6[%c0_40, %c2_41], %43 {strides = array<i32>} : memref<8x132xf32, #tpu.memory_space<vmem>>, vector<4x16xf32>,
    %c0_42 = arith.constant 0 : index
    %c0_43 = arith.constant 0 : index
    %c0_44 = arith.constant 0 : index
    %45 = vector.load %arg2[%c0_42, %c0_43, %c0_44] : memref<3x16x8xf32, #tpu.memory_space<vmem>>, vector<1x16x8xf32>
    %46 = vector.shape_cast %45 : vector<1x16x8xf32> to vector<16x8xf32>
    %c0_45 = arith.constant 0 : index
    %c0_46 = arith.constant 0 : index
    %47 = vector.load %arg6[%c0_45, %c0_46] : memref<8x132xf32, #tpu.memory_space<vmem>>, vector<8x128xf32>
    %cst_47 = arith.constant dense<0.000000e+00> : vector<16x128xf32>
    %48 = tpu.matmul %46, %47, %cst_47 {dimension_numbers = #tpu.dot_dimension_numbers<[1], [0], [0], [1], [0, 0, 1, 1], [], []>} : vector<16x8xf32>, vector<8x128xf32>, vector<16x128xf32> -> vector<16x128xf32>
    %c1_48 = arith.constant 1 : index
    %c0_49 = arith.constant 0 : index
    %c0_50 = arith.constant 0 : index
    %49 = vector.load %arg2[%c1_48, %c0_49, %c0_50] : memref<3x16x8xf32, #tpu.memory_space<vmem>>, vector<1x16x8xf32>
    %50 = vector.shape_cast %49 : vector<1x16x8xf32> to vector<16x8xf32>
    %c0_51 = arith.constant 0 : index
    %c2_52 = arith.constant 2 : index
    %51 = vector.load %arg6[%c0_51, %c2_52] : memref<8x132xf32, #tpu.memory_space<vmem>>, vector<8x128xf32>
    %cst_53 = arith.constant dense<0.000000e+00> : vector<16x128xf32>
    %52 = tpu.matmul %50, %51, %cst_53 {dimension_numbers = #tpu.dot_dimension_numbers<[1], [0], [0], [1], [0, 0, 1, 1], [], []>} : vector<16x8xf32>, vector<8x128xf32>, vector<16x128xf32> -> vector<16x128xf32>
    %53 = arith.addf %48, %52 : vector<16x128xf32>
    %c2_54 = arith.constant 2 : index
    %c0_55 = arith.constant 0 : index
    %c0_56 = arith.constant 0 : index
    %54 = vector.load %arg2[%c2_54, %c0_55, %c0_56] : memref<3x16x8xf32, #tpu.memory_space<vmem>>, vector<1x16x8xf32>
    %55 = vector.shape_cast %54 : vector<1x16x8xf32> to vector<16x8xf32>
    %c0_57 = arith.constant 0 : index
    %c4_58 = arith.constant 4 : index
    %56 = vector.load %arg6[%c0_57, %c4_58] : memref<8x132xf32, #tpu.memory_space<vmem>>, vector<8x128xf32>
    %cst_59 = arith.constant dense<0.000000e+00> : vector<16x128xf32>
    %57 = tpu.matmul %55, %56, %cst_59 {dimension_numbers = #tpu.dot_dimension_numbers<[1], [0], [0], [1], [0, 0, 1, 1], [], []>} : vector<16x8xf32>, vector<8x128xf32>, vector<16x128xf32> -> vector<16x128xf32>
    %58 = arith.addf %53, %57 : vector<16x128xf32>
    %c0_60 = arith.constant 0 : index
    %c0_61 = arith.constant 0 : index
    %59 = vector.load %arg3[%c0_60, %c0_61] : memref<16x1xf32, #tpu.memory_space<vmem>>, vector<16x1xf32>
    %60 = vector.broadcast %59 : vector<16x1xf32> to vector<16x128xf32>
    %61 = arith.addf %58, %60 : vector<16x128xf32>
    %62 = vector.extract_strided_slice %61 {offsets = [0, 0], sizes = [8, 128], strides = [1, 1]} : vector<16x128xf32> to vector<8x128xf32>
    %63 = vector.extract_strided_slice %61 {offsets = [8, 0], sizes = [8, 128], strides = [1, 1]} : vector<16x128xf32> to vector<8x128xf32>
    %64 = arith.negf %63 : vector<8x128xf32>
    %65 = math.exp %64 : vector<8x128xf32>
    %cst_62 = arith.constant 1.000000e+00 : f32
    %66 = vector.broadcast %cst_62 : f32 to vector<8x128xf32>
    %67 = arith.addf %66, %65 : vector<8x128xf32>
    %68 = arith.divf %66, %67 : vector<8x128xf32>
    %69 = arith.mulf %62, %68 : vector<8x128xf32>
    %c1_63 = arith.constant 1 : index
    %c0_64 = arith.constant 0 : index
    %c0_65 = arith.constant 0 : index
    %70 = vector.load %arg5[%c1_63, %c0_64, %c0_65] : memref<2x8x128xf32, #tpu.memory_space<vmem>>, vector<1x8x128xf32>
    %71 = vector.shape_cast %70 : vector<1x8x128xf32> to vector<8x128xf32>
    %72 = vector.shape_cast %69 : vector<8x128xf32> to vector<1x8x128xf32>
    tpu.vector_store %arg5[%c1_63, %c0_64, %c0_65], %72 {strides = array<i32>} : memref<2x8x128xf32, #tpu.memory_space<vmem>>, vector<1x8x128xf32>,
    %c0_66 = arith.constant 0 : index
    %c2_67 = arith.constant 2 : index
    %73 = vector.load %arg6[%c0_66, %c2_67] : memref<8x132xf32, #tpu.memory_space<vmem>>, vector<8x128xf32>
    %74 = arith.addf %73, %69 : vector<8x128xf32>
    %c1_68 = arith.constant 1 : index
    %c0_69 = arith.constant 0 : index
    %c0_70 = arith.constant 0 : index
    %75 = vector.load %arg4[%c1_68, %c0_69, %c0_70] : memref<2x8x128xf32, #tpu.memory_space<vmem>>, vector<1x8x128xf32>
    %76 = vector.shape_cast %75 : vector<1x8x128xf32> to vector<8x128xf32>
    %77 = vector.shape_cast %74 : vector<8x128xf32> to vector<1x8x128xf32>
    tpu.vector_store %arg4[%c1_68, %c0_69, %c0_70], %77 {strides = array<i32>} : memref<2x8x128xf32, #tpu.memory_space<vmem>>, vector<1x8x128xf32>,
    return
  }
  func.func @transform_0(%arg0: i32) -> (i32, i32, i32) {
    %c0_i32 = arith.constant 0 : i32
    %c0_i32_0 = arith.constant 0 : i32
    %c0_i32_1 = arith.constant 0 : i32
    return %arg0, %c0_i32, %c0_i32_0 : i32, i32, i32
  }
  func.func @transform_1(%arg0: i32) -> (i32, i32, i32) {
    %c0_i32 = arith.constant 0 : i32
    %c0_i32_0 = arith.constant 0 : i32
    %c0_i32_1 = arith.constant 0 : i32
    %c0_i32_2 = arith.constant 0 : i32
    return %c0_i32, %c0_i32_0, %c0_i32_1 : i32, i32, i32
  }
  func.func @transform_2(%arg0: i32) -> (i32, i32) {
    %c0_i32 = arith.constant 0 : i32
    %c0_i32_0 = arith.constant 0 : i32
    %c0_i32_1 = arith.constant 0 : i32
    return %c0_i32, %c0_i32_0 : i32, i32
  }
  func.func @transform_3(%arg0: i32) -> (i32, i32, i32) {
    %c0_i32 = arith.constant 0 : i32
    %c0_i32_0 = arith.constant 0 : i32
    %c0_i32_1 = arith.constant 0 : i32
    return %arg0, %c0_i32, %c0_i32_0 : i32, i32, i32
  }
  func.func @transform_4(%arg0: i32) -> (i32, i32, i32) {
    %c0_i32 = arith.constant 0 : i32
    %c0_i32_0 = arith.constant 0 : i32
    %c0_i32_1 = arith.constant 0 : i32
    return %arg0, %c0_i32, %c0_i32_0 : i32, i32, i32
  }
}

</mosaic_0001>

<llo_original>
// kernel: tpu_custom_call.1
$region0: #{tpu_custom_call.1}
  #allocation0 [shape = 'u32[]', space=smem, size = 0x4, offset = 0x4, fixed_abs, tag = 'smem constant byte address 0x4 - core index']
  #allocation1 [shape = 'u32[144,128]{1,0:T(1,128)}', space=vmem, size = 0x12000, scoped, tag = 'internal scratch']
  #allocation2 [shape = 'f32[8,132]{1,0:T(8,128)}', space=vmem, size = 0x2000, scoped, tag = 'scratch operand']
  %s0 = inlined_call_operand.vmem [shape: f32[2,4,16], index: 0, kind: input, shape index: {}]
  %s1 = inlined_call_operand.vmem [shape: f32[3,16,8], index: 1, kind: input, shape index: {}]
  %s2 = inlined_call_operand.vmem [shape: f32[16,1], index: 2, kind: input, shape index: {}]
  %s3 = inlined_call_operand.hbm [shape: f32[2,8,128], index: 3, kind: output, shape index: {0}]
  %s4 = inlined_call_operand.hbm [shape: f32[2,8,128], index: 4, kind: output, shape index: {1}]
  %5 = xla_tuple %s3, %s4
  %s6 = sld [smem:[#allocation0]]
  $region30: #{tpu_custom_call.1} parent=0
    _
  %s8 = ssub.s32 1, %s6
  %s9 = scalar_select 0, %s8, %s6
  $region1: #{tpu_custom_call.1} parent=0
    #allocation3 [shape = 'u8[8192]{0}', space=vmem, size = 0x2000, scoped, tag = 'output window, operand 0, single buffered']
    #allocation4 [shape = 's32[1]{0}', space=sflag, size = 0x4, scoped, tag = 'scoped memory for tpu_custom_call.1']
    #allocation5 [shape = 'u8[8192]{0}', space=vmem, size = 0x2000, scoped, tag = 'output window, operand 1, single buffered']
    #allocation6 [shape = 's32[1]{0}', space=sflag, size = 0x4, scoped, tag = 'scoped memory for tpu_custom_call.1']
    %10 = vsyncpa [#allocation4], 0
    %11 = vsyncpa [#allocation6], 0
    // Predicated region
    $region2: #{tpu_custom_call.1} parent=1 // pred_check
      _
    $region3: #{tpu_custom_call.1} parent=1 // pred_check_branch
      %13 = sbr.rel (0) target = $region5
    $region4: #{tpu_custom_call.1} parent=1 // pred_region
      _
    $region5: #{tpu_custom_call.1} parent=1 // pred_fallthru
      _
    // Predicated region
    $region6: #{tpu_custom_call.1} parent=1 // pred_check
      _
    $region7: #{tpu_custom_call.1} parent=1 // pred_check_branch
      %15 = sbr.rel (0) target = $region9
    $region8: #{tpu_custom_call.1} parent=1 // pred_region
      _
    $region9: #{tpu_custom_call.1} parent=1 // pred_fallthru
      _
    // Predicated region
    $region10: #{tpu_custom_call.1} parent=1 // pred_check
      _
    $region11: #{tpu_custom_call.1} parent=1 // pred_check_branch
      %17 = sbr.rel (0) target = $region13
    $region12: #{tpu_custom_call.1} parent=1 // pred_region
      _
    $region13: #{tpu_custom_call.1} parent=1 // pred_fallthru
      _
    %vm18 = vcmask 15360
    %19 = vst.msk [vmem:[#allocation2] sm:$0xff] %vm18, 0.0
    %vm20 = vcmask 1047696
    %21 = vst.msk [vmem:[#allocation2] sm:$0xff] %vm20, 0.0
    %vm22 = vcmask 31744
    %23 = vst.msk [vmem:[#allocation2 + $0x8] sm:$0xff] %vm22, 0.0
    %vm24 = vcmask 146452
    %25 = vst.msk [vmem:[#allocation2] sm:$0xf0] %vm24, 0.0
    %v26 = vld [vmem:[%s0] sm:$0xf]
    %28 = vrot.lane.b32.xlu0 %v26, 2
    %v29 = vpop.permute.xlu0 %28
    %vm31 = vcmask 142352
    %32 = vst.msk [vmem:[#allocation2] sm:$0xf] %vm31, %v29
    %v33 = vld [vmem:[%s1] sm:$0xff]
    %v34 = vld [vmem:[%s1 + $0x8] sm:$0xff]
    %v35 = vld [vmem:[#allocation2] sm:$0xff]
    %s36 = scalar_lea.vmem %s1, 16
    %v37 = vld [vmem:[%s36] sm:$0xff]
    %v38 = vld [vmem:[%s36 + $0x8] sm:$0xff]
    %v39 = vld [vmem:[#allocation2 + $0x8] sm:$0xff]
    %42 = vrot.lane.b32.xlu0 %v35, 126
    %v43 = vpop.permute.xlu0 %42
    %44 = vrot.lane.b32.xlu0 %v39, 126
    %v45 = vpop.permute.xlu0 %44
    %vm46 = vcmask 1031168
    %v47 = vsel %vm46, %v43, %v45
    %vm49 = vcmask 64512
    %v51 = vsel %vm49, %v37, 0
    %v54 = vsel %vm49, %v38, 0
    %56 = vmatprep.subr.mxu0 0.0
    %57 = vmatpush1.msra.mxu0 %v47
    %58 = vmatprep.subr.mxu0 0.0
    %59 = vmatpush1.msra.mxu0 0.0
    %60 = vmatprep.subr.mxu0 0.0
    %61 = vmatpush1.msra.mxu0 0.0
    %62 = vmatprep.subr.mxu0 0.0
    %63 = vmatpush1.msra.mxu0 0.0
    %64 = vmatprep.subr.mxu0 0.0
    %65 = vmatpush1.msra.mxu0 0.0
    %66 = vmatprep.subr.mxu0 0.0
    %67 = vmatpush1.msra.mxu0 0.0
    %68 = vmatprep.subr.mxu0 0.0
    %69 = vmatpush1.msra.mxu0 0.0
    %70 = vmatprep.subr.mxu0 0.0
    %71 = vmatpush1.msra.mxu0 0.0
    %72 = vmatprep.subr.mxu0 0.0
    %73 = vmatpush1.msra.mxu0 0.0
    %74 = vmatprep.subr.mxu0 0.0
    %75 = vmatpush1.msra.mxu0 0.0
    %76 = vmatprep.subr.mxu0 0.0
    %77 = vmatpush1.msra.mxu0 0.0
    %78 = vmatprep.subr.mxu0 0.0
    %79 = vmatpush1.msra.mxu0 0.0
    %80 = vmatprep.subr.mxu0 0.0
    %81 = vmatpush1.msra.mxu0 0.0
    %82 = vmatprep.subr.mxu0 0.0
    %83 = vmatpush1.msra.mxu0 0.0
    %84 = vmatprep.subr.mxu0 0.0
    %85 = vmatpush1.msra.mxu0 0.0
    %86 = vmatprep.subr.mxu0 0.0
    %87 = vmatpush1.msra.mxu0 0.0
    %88 = vmatprep.subr.mxu0 0.0
    %89 = vmatpush1.msra.mxu0 0.0
    %90 = vmatprep.subr.mxu0 0.0
    %91 = vmatpush1.msra.mxu0 0.0
    %92 = vmatprep.subr.mxu0 0.0
    %93 = vmatpush1.msra.mxu0 0.0
    %94 = vmatprep.subr.mxu0 0.0
    %95 = vmatpush1.msra.mxu0 0.0
    %96 = vmatprep.subr.mxu0 0.0
    %97 = vmatpush1.msra.mxu0 0.0
    %98 = vmatprep.subr.mxu0 0.0
    %99 = vmatpush1.msra.mxu0 0.0
    %100 = vmatprep.subr.mxu0 0.0
    %101 = vmatpush1.msra.mxu0 0.0
    %102 = vmatprep.subr.mxu0 0.0
    %103 = vmatpush1.msra.mxu0 0.0
    %104 = vmatprep.subr.mxu0 0.0
    %105 = vmatpush1.msra.mxu0 0.0
    %106 = vmatprep.subr.mxu0 0.0
    %107 = vmatpush1.msra.mxu0 0.0
    %108 = vmatprep.subr.mxu0 0.0
    %109 = vmatpush1.msra.mxu0 0.0
    %110 = vmatprep.subr.mxu0 0.0
    %111 = vmatpush1.msra.mxu0 0.0
    %112 = vmatprep.subr.mxu0 0.0
    %113 = vmatpush1.msra.mxu0 0.0
    %114 = vmatprep.subr.mxu0 0.0
    %115 = vmatpush1.msra.mxu0 0.0
    %116 = vmatprep.subr.mxu0 0.0
    %117 = vmatpush1.msra.mxu0 0.0
    %118 = vmatprep.subr.mxu0 0.0
    %119 = vmatpush1.msra.mxu0 0.0
    %120 = vmatprep.mubr.f32.mxu0 0.0
    %121 = vmatmul.mubr.f32.gmra.mrb[0].mxu0 %v51
    %v122 = vpop.f32.mrb[0].mxu0
    %v123 = vadd.f32 0.0, %v122
    %v124 = vpop.f32.mrb[0].mxu0
    %125 = vmatprep.mubr.f32.mxu0 0.0
    %126 = vmatmul.mubr.f32.gmra.mrb[0].mxu0 %v54
    %v127 = vpop.f32.mrb[0].mxu0
    %v128 = vadd.f32 0.0, %v127
    %v129 = vpop.f32.mrb[0].mxu0
    %130 = vdwg.mxu0
    %v132 = vsel %vm49, %v33, 0
    %v135 = vsel %vm49, %v34, 0
    %137 = vmatprep.subr.mxu0 0.0
    %138 = vmatpush1.msra.mxu0 %v35
    %139 = vmatprep.subr.mxu0 0.0
    %140 = vmatpush1.msra.mxu0 0.0
    %141 = vmatprep.subr.mxu0 0.0
    %142 = vmatpush1.msra.mxu0 0.0
    %143 = vmatprep.subr.mxu0 0.0
    %144 = vmatpush1.msra.mxu0 0.0
    %145 = vmatprep.subr.mxu0 0.0
    %146 = vmatpush1.msra.mxu0 0.0
    %147 = vmatprep.subr.mxu0 0.0
    %148 = vmatpush1.msra.mxu0 0.0
    %149 = vmatprep.subr.mxu0 0.0
    %150 = vmatpush1.msra.mxu0 0.0
    %151 = vmatprep.subr.mxu0 0.0
    %152 = vmatpush1.msra.mxu0 0.0
    %153 = vmatprep.subr.mxu0 0.0
    %154 = vmatpush1.msra.mxu0 0.0
    %155 = vmatprep.subr.mxu0 0.0
    %156 = vmatpush1.msra.mxu0 0.0
    %157 = vmatprep.subr.mxu0 0.0
    %158 = vmatpush1.msra.mxu0 0.0
    %159 = vmatprep.subr.mxu0 0.0
    %160 = vmatpush1.msra.mxu0 0.0
    %161 = vmatprep.subr.mxu0 0.0
    %162 = vmatpush1.msra.mxu0 0.0
    %163 = vmatprep.subr.mxu0 0.0
    %164 = vmatpush1.msra.mxu0 0.0
    %165 = vmatprep.subr.mxu0 0.0
    %166 = vmatpush1.msra.mxu0 0.0
    %167 = vmatprep.subr.mxu0 0.0
    %168 = vmatpush1.msra.mxu0 0.0
    %169 = vmatprep.subr.mxu0 0.0
    %170 = vmatpush1.msra.mxu0 0.0
    %171 = vmatprep.subr.mxu0 0.0
    %172 = vmatpush1.msra.mxu0 0.0
    %173 = vmatprep.subr.mxu0 0.0
    %174 = vmatpush1.msra.mxu0 0.0
    %175 = vmatprep.subr.mxu0 0.0
    %176 = vmatpush1.msra.mxu0 0.0
    %177 = vmatprep.subr.mxu0 0.0
    %178 = vmatpush1.msra.mxu0 0.0
    %179 = vmatprep.subr.mxu0 0.0
    %180 = vmatpush1.msra.mxu0 0.0
    %181 = vmatprep.subr.mxu0 0.0
    %182 = vmatpush1.msra.mxu0 0.0
    %183 = vmatprep.subr.mxu0 0.0
    %184 = vmatpush1.msra.mxu0 0.0
    %185 = vmatprep.subr.mxu0 0.0
    %186 = vmatpush1.msra.mxu0 0.0
    %187 = vmatprep.subr.mxu0 0.0
    %188 = vmatpush1.msra.mxu0 0.0
    %189 = vmatprep.subr.mxu0 0.0
    %190 = vmatpush1.msra.mxu0 0.0
    %191 = vmatprep.subr.mxu0 0.0
    %192 = vmatpush1.msra.mxu0 0.0
    %193 = vmatprep.subr.mxu0 0.0
    %194 = vmatpush1.msra.mxu0 0.0
    %195 = vmatprep.subr.mxu0 0.0
    %196 = vmatpush1.msra.mxu0 0.0
    %197 = vmatprep.subr.mxu0 0.0
    %198 = vmatpush1.msra.mxu0 0.0
    %199 = vmatprep.subr.mxu0 0.0
    %200 = vmatpush1.msra.mxu0 0.0
    %201 = vmatprep.mubr.f32.mxu0 0.0
    %202 = vmatmul.mubr.f32.gmra.mrb[0].mxu0 %v132
    %v203 = vpop.f32.mrb[0].mxu0
    %v204 = vadd.f32 %v123, %v203
    %v205 = vpop.f32.mrb[0].mxu0
    %206 = vmatprep.mubr.f32.mxu0 0.0
    %207 = vmatmul.mubr.f32.gmra.mrb[0].mxu0 %v135
    %v208 = vpop.f32.mrb[0].mxu0
    %v209 = vadd.f32 %v128, %v208
    %v210 = vpop.f32.mrb[0].mxu0
    %211 = vdwg.mxu0
    %s212 = scalar_lea.vmem %s1, 32
    %v213 = vld [vmem:[%s212] sm:$0xff]
    %v214 = vld [vmem:[%s212 + $0x8] sm:$0xff]
    %215 = vrot.lane.b32.xlu0 %v35, 124
    %v216 = vpop.permute.xlu0 %215
    %217 = vrot.lane.b32.xlu0 %v39, 124
    %v218 = vpop.permute.xlu0 %217
    %vm219 = vcmask 1014784
    %v220 = vsel %vm219, %v216, %v218
    %v223 = vsel %vm49, %v213, 0
    %v226 = vsel %vm49, %v214, 0
    %228 = vmatprep.subr.mxu0 0.0
    %229 = vmatpush1.msra.mxu0 %v220
    %230 = vmatprep.subr.mxu0 0.0
    %231 = vmatpush1.msra.mxu0 0.0
    %232 = vmatprep.subr.mxu0 0.0
    %233 = vmatpush1.msra.mxu0 0.0
    %234 = vmatprep.subr.mxu0 0.0
    %235 = vmatpush1.msra.mxu0 0.0
    %236 = vmatprep.subr.mxu0 0.0
    %237 = vmatpush1.msra.mxu0 0.0
    %238 = vmatprep.subr.mxu0 0.0
    %239 = vmatpush1.msra.mxu0 0.0
    %240 = vmatprep.subr.mxu0 0.0
    %241 = vmatpush1.msra.mxu0 0.0
    %242 = vmatprep.subr.mxu0 0.0
    %243 = vmatpush1.msra.mxu0 0.0
    %244 = vmatprep.subr.mxu0 0.0
    %245 = vmatpush1.msra.mxu0 0.0
    %246 = vmatprep.subr.mxu0 0.0
    %247 = vmatpush1.msra.mxu0 0.0
    %248 = vmatprep.subr.mxu0 0.0
    %249 = vmatpush1.msra.mxu0 0.0
    %250 = vmatprep.subr.mxu0 0.0
    %251 = vmatpush1.msra.mxu0 0.0
    %252 = vmatprep.subr.mxu0 0.0
    %253 = vmatpush1.msra.mxu0 0.0
    %254 = vmatprep.subr.mxu0 0.0
    %255 = vmatpush1.msra.mxu0 0.0
    %256 = vmatprep.subr.mxu0 0.0
    %257 = vmatpush1.msra.mxu0 0.0
    %258 = vmatprep.subr.mxu0 0.0
    %259 = vmatpush1.msra.mxu0 0.0
    %260 = vmatprep.subr.mxu0 0.0
    %261 = vmatpush1.msra.mxu0 0.0
    %262 = vmatprep.subr.mxu0 0.0
    %263 = vmatpush1.msra.mxu0 0.0
    %264 = vmatprep.subr.mxu0 0.0
    %265 = vmatpush1.msra.mxu0 0.0
    %266 = vmatprep.subr.mxu0 0.0
    %267 = vmatpush1.msra.mxu0 0.0
    %268 = vmatprep.subr.mxu0 0.0
    %269 = vmatpush1.msra.mxu0 0.0
    %270 = vmatprep.subr.mxu0 0.0
    %271 = vmatpush1.msra.mxu0 0.0
    %272 = vmatprep.subr.mxu0 0.0
    %273 = vmatpush1.msra.mxu0 0.0
    %274 = vmatprep.subr.mxu0 0.0
    %275 = vmatpush1.msra.mxu0 0.0
    %276 = vmatprep.subr.mxu0 0.0
    %277 = vmatpush1.msra.mxu0 0.0
    %278 = vmatprep.subr.mxu0 0.0
    %279 = vmatpush1.msra.mxu0 0.0
    %280 = vmatprep.subr.mxu0 0.0
    %281 = vmatpush1.msra.mxu0 0.0
    %282 = vmatprep.subr.mxu0 0.0
    %283 = vmatpush1.msra.mxu0 0.0
    %284 = vmatprep.subr.mxu0 0.0
    %285 = vmatpush1.msra.mxu0 0.0
    %286 = vmatprep.subr.mxu0 0.0
    %287 = vmatpush1.msra.mxu0 0.0
    %288 = vmatprep.subr.mxu0 0.0
    %289 = vmatpush1.msra.mxu0 0.0
    %290 = vmatprep.subr.mxu0 0.0
    %291 = vmatpush1.msra.mxu0 0.0
    %292 = vmatprep.mubr.f32.mxu0 0.0
    %293 = vmatmul.mubr.f32.gmra.mrb[0].mxu0 %v223
    %v294 = vpop.f32.mrb[0].mxu0
    %v295 = vadd.f32 0.0, %v294
    %v296 = vpop.f32.mrb[0].mxu0
    %297 = vmatprep.mubr.f32.mxu0 0.0
    %298 = vmatmul.mubr.f32.gmra.mrb[0].mxu0 %v226
    %v299 = vpop.f32.mrb[0].mxu0
    %v300 = vadd.f32 0.0, %v299
    %v301 = vpop.f32.mrb[0].mxu0
    %302 = vdwg.mxu0
    %v303 = vadd.f32 %v204, %v295
    %v304 = vadd.f32 %v209, %v300
    %v305 = vld [vmem:[%s2] sm:$0xff]
    %v306 = vld [vmem:[%s2 + $0x8] sm:$0xff]
    %308 = vset.pattern.permute.xlu0 0
    %309 = vperm.xlu0 %308, %v305
    %v310 = vpop.permute.xlu0 %309
    %313 = vset.pattern.permute.xlu0 0
    %314 = vperm.xlu0 %313, %v306
    %v315 = vpop.permute.xlu0 %314
    %v317 = vadd.f32 %v303, %v310
    %v318 = vadd.f32 %v304, %v315
    %v319 = vxor.u32 %v318, 2147483648
    %v320 = vmul.f32 %v319, 1.442695
    %v321 = vpow.pop %v320
    %v322 = vadd.f32 %v321, 1.0
    %v323 = vrcp.pop %v322
    %v324 = vmul.f32 1.0, %v323
    %v325 = vmul.f32 %v317, %v324
    %326 = vst [vmem:[#allocation5] sm:$0xff] %v325
    %v327 = vld [vmem:[#allocation2] sm:$0xff]
    %v328 = vld [vmem:[#allocation2 + $0x8] sm:$0xff]
    %330 = vrot.lane.b32.xlu0 %v325, 2
    %v331 = vpop.permute.xlu0 %330
    %v333 = vadd.f32 %v327, %v331
    %v334 = vadd.f32 %v328, %v331
    %337 = vrot.lane.b32.xlu0 %v333, 126
    %v338 = vpop.permute.xlu0 %337
    %339 = vrot.lane.b32.xlu0 %v334, 126
    %v340 = vpop.permute.xlu0 %339
    %v341 = vsel %vm46, %v338, %v340
    %343 = vst [vmem:[#allocation3] sm:$0xff] %v341
    %s344 = scalar_lea.vmem %s0, 4
    %v345 = vld [vmem:[%s344] sm:$0xf]
    %347 = vrot.lane.b32.xlu0 %v345, 2
    %v348 = vpop.permute.xlu0 %347
    %350 = vst.msk [vmem:[#allocation2] sm:$0xf] %vm31, %v348
    %v351 = vld [vmem:[%s1] sm:$0xff]
    %v352 = vld [vmem:[%s1 + $0x8] sm:$0xff]
    %v353 = vld [vmem:[#allocation2] sm:$0xff]
    %v354 = vld [vmem:[%s36] sm:$0xff]
    %v355 = vld [vmem:[%s36 + $0x8] sm:$0xff]
    %v356 = vld [vmem:[#allocation2 + $0x8] sm:$0xff]
    %359 = vrot.lane.b32.xlu0 %v353, 126
    %v360 = vpop.permute.xlu0 %359
    %361 = vrot.lane.b32.xlu0 %v356, 126
    %v362 = vpop.permute.xlu0 %361
    %v363 = vsel %vm46, %v360, %v362
    %v366 = vsel %vm49, %v354, 0
    %v369 = vsel %vm49, %v355, 0
    %371 = vmatprep.subr.mxu0 0.0
    %372 = vmatpush1.msra.mxu0 %v363
    %373 = vmatprep.subr.mxu0 0.0
    %374 = vmatpush1.msra.mxu0 0.0
    %375 = vmatprep.subr.mxu0 0.0
    %376 = vmatpush1.msra.mxu0 0.0
    %377 = vmatprep.subr.mxu0 0.0
    %378 = vmatpush1.msra.mxu0 0.0
    %379 = vmatprep.subr.mxu0 0.0
    %380 = vmatpush1.msra.mxu0 0.0
    %381 = vmatprep.subr.mxu0 0.0
    %382 = vmatpush1.msra.mxu0 0.0
    %383 = vmatprep.subr.mxu0 0.0
    %384 = vmatpush1.msra.mxu0 0.0
    %385 = vmatprep.subr.mxu0 0.0
    %386 = vmatpush1.msra.mxu0 0.0
    %387 = vmatprep.subr.mxu0 0.0
    %388 = vmatpush1.msra.mxu0 0.0
    %389 = vmatprep.subr.mxu0 0.0
    %390 = vmatpush1.msra.mxu0 0.0
    %391 = vmatprep.subr.mxu0 0.0
    %392 = vmatpush1.msra.mxu0 0.0
    %393 = vmatprep.subr.mxu0 0.0
    %394 = vmatpush1.msra.mxu0 0.0
    %395 = vmatprep.subr.mxu0 0.0
    %396 = vmatpush1.msra.mxu0 0.0
    %397 = vmatprep.subr.mxu0 0.0
    %398 = vmatpush1.msra.mxu0 0.0
    %399 = vmatprep.subr.mxu0 0.0
    %400 = vmatpush1.msra.mxu0 0.0
    %401 = vmatprep.subr.mxu0 0.0
    %402 = vmatpush1.msra.mxu0 0.0
    %403 = vmatprep.subr.mxu0 0.0
    %404 = vmatpush1.msra.mxu0 0.0
    %405 = vmatprep.subr.mxu0 0.0
    %406 = vmatpush1.msra.mxu0 0.0
    %407 = vmatprep.subr.mxu0 0.0
    %408 = vmatpush1.msra.mxu0 0.0
    %409 = vmatprep.subr.mxu0 0.0
    %410 = vmatpush1.msra.mxu0 0.0
    %411 = vmatprep.subr.mxu0 0.0
    %412 = vmatpush1.msra.mxu0 0.0
    %413 = vmatprep.subr.mxu0 0.0
    %414 = vmatpush1.msra.mxu0 0.0
    %415 = vmatprep.subr.mxu0 0.0
    %416 = vmatpush1.msra.mxu0 0.0
    %417 = vmatprep.subr.mxu0 0.0
    %418 = vmatpush1.msra.mxu0 0.0
    %419 = vmatprep.subr.mxu0 0.0
    %420 = vmatpush1.msra.mxu0 0.0
    %421 = vmatprep.subr.mxu0 0.0
    %422 = vmatpush1.msra.mxu0 0.0
    %423 = vmatprep.subr.mxu0 0.0
    %424 = vmatpush1.msra.mxu0 0.0
    %425 = vmatprep.subr.mxu0 0.0
    %426 = vmatpush1.msra.mxu0 0.0
    %427 = vmatprep.subr.mxu0 0.0
    %428 = vmatpush1.msra.mxu0 0.0
    %429 = vmatprep.subr.mxu0 0.0
    %430 = vmatpush1.msra.mxu0 0.0
    %431 = vmatprep.subr.mxu0 0.0
    %432 = vmatpush1.msra.mxu0 0.0
    %433 = vmatprep.subr.mxu0 0.0
    %434 = vmatpush1.msra.mxu0 0.0
    %435 = vmatprep.mubr.f32.mxu0 0.0
    %436 = vmatmul.mubr.f32.gmra.mrb[0].mxu0 %v366
    %v437 = vpop.f32.mrb[0].mxu0
    %v438 = vadd.f32 0.0, %v437
    %v439 = vpop.f32.mrb[0].mxu0
    %440 = vmatprep.mubr.f32.mxu0 0.0
    %441 = vmatmul.mubr.f32.gmra.mrb[0].mxu0 %v369
    %v442 = vpop.f32.mrb[0].mxu0
    %v443 = vadd.f32 0.0, %v442
    %v444 = vpop.f32.mrb[0].mxu0
    %445 = vdwg.mxu0
    %v447 = vsel %vm49, %v351, 0
    %v450 = vsel %vm49, %v352, 0
    %452 = vmatprep.subr.mxu0 0.0
    %453 = vmatpush1.msra.mxu0 %v353
    %454 = vmatprep.subr.mxu0 0.0
    %455 = vmatpush1.msra.mxu0 0.0
    %456 = vmatprep.subr.mxu0 0.0
    %457 = vmatpush1.msra.mxu0 0.0
    %458 = vmatprep.subr.mxu0 0.0
    %459 = vmatpush1.msra.mxu0 0.0
    %460 = vmatprep.subr.mxu0 0.0
    %461 = vmatpush1.msra.mxu0 0.0
    %462 = vmatprep.subr.mxu0 0.0
    %463 = vmatpush1.msra.mxu0 0.0
    %464 = vmatprep.subr.mxu0 0.0
    %465 = vmatpush1.msra.mxu0 0.0
    %466 = vmatprep.subr.mxu0 0.0
    %467 = vmatpush1.msra.mxu0 0.0
    %468 = vmatprep.subr.mxu0 0.0
    %469 = vmatpush1.msra.mxu0 0.0
    %470 = vmatprep.subr.mxu0 0.0
    %471 = vmatpush1.msra.mxu0 0.0
    %472 = vmatprep.subr.mxu0 0.0
    %473 = vmatpush1.msra.mxu0 0.0
    %474 = vmatprep.subr.mxu0 0.0
    %475 = vmatpush1.msra.mxu0 0.0
    %476 = vmatprep.subr.mxu0 0.0
    %477 = vmatpush1.msra.mxu0 0.0
    %478 = vmatprep.subr.mxu0 0.0
    %479 = vmatpush1.msra.mxu0 0.0
    %480 = vmatprep.subr.mxu0 0.0
    %481 = vmatpush1.msra.mxu0 0.0
    %482 = vmatprep.subr.mxu0 0.0
    %483 = vmatpush1.msra.mxu0 0.0
    %484 = vmatprep.subr.mxu0 0.0
    %485 = vmatpush1.msra.mxu0 0.0
    %486 = vmatprep.subr.mxu0 0.0
    %487 = vmatpush1.msra.mxu0 0.0
    %488 = vmatprep.subr.mxu0 0.0
    %489 = vmatpush1.msra.mxu0 0.0
    %490 = vmatprep.subr.mxu0 0.0
    %491 = vmatpush1.msra.mxu0 0.0
    %492 = vmatprep.subr.mxu0 0.0
    %493 = vmatpush1.msra.mxu0 0.0
    %494 = vmatprep.subr.mxu0 0.0
    %495 = vmatpush1.msra.mxu0 0.0
    %496 = vmatprep.subr.mxu0 0.0
    %497 = vmatpush1.msra.mxu0 0.0
    %498 = vmatprep.subr.mxu0 0.0
    %499 = vmatpush1.msra.mxu0 0.0
    %500 = vmatprep.subr.mxu0 0.0
    %501 = vmatpush1.msra.mxu0 0.0
    %502 = vmatprep.subr.mxu0 0.0
    %503 = vmatpush1.msra.mxu0 0.0
    %504 = vmatprep.subr.mxu0 0.0
    %505 = vmatpush1.msra.mxu0 0.0
    %506 = vmatprep.subr.mxu0 0.0
    %507 = vmatpush1.msra.mxu0 0.0
    %508 = vmatprep.subr.mxu0 0.0
    %509 = vmatpush1.msra.mxu0 0.0
    %510 = vmatprep.subr.mxu0 0.0
    %511 = vmatpush1.msra.mxu0 0.0
    %512 = vmatprep.subr.mxu0 0.0
    %513 = vmatpush1.msra.mxu0 0.0
    %514 = vmatprep.subr.mxu0 0.0
    %515 = vmatpush1.msra.mxu0 0.0
    %516 = vmatprep.mubr.f32.mxu0 0.0
    %517 = vmatmul.mubr.f32.gmra.mrb[0].mxu0 %v447
    %v518 = vpop.f32.mrb[0].mxu0
    %v519 = vadd.f32 %v438, %v518
    %v520 = vpop.f32.mrb[0].mxu0
    %521 = vmatprep.mubr.f32.mxu0 0.0
    %522 = vmatmul.mubr.f32.gmra.mrb[0].mxu0 %v450
    %v523 = vpop.f32.mrb[0].mxu0
    %v524 = vadd.f32 %v443, %v523
    %v525 = vpop.f32.mrb[0].mxu0
    %526 = vdwg.mxu0
    %v527 = vld [vmem:[%s212] sm:$0xff]
    %v528 = vld [vmem:[%s212 + $0x8] sm:$0xff]
    %529 = vrot.lane.b32.xlu0 %v353, 124
    %v530 = vpop.permute.xlu0 %529
    %531 = vrot.lane.b32.xlu0 %v356, 124
    %v532 = vpop.permute.xlu0 %531
    %v533 = vsel %vm219, %v530, %v532
    %v536 = vsel %vm49, %v527, 0
    %v539 = vsel %vm49, %v528, 0
    %541 = vmatprep.subr.mxu0 0.0
    %542 = vmatpush1.msra.mxu0 %v533
    %543 = vmatprep.subr.mxu0 0.0
    %544 = vmatpush1.msra.mxu0 0.0
    %545 = vmatprep.subr.mxu0 0.0
    %546 = vmatpush1.msra.mxu0 0.0
    %547 = vmatprep.subr.mxu0 0.0
    %548 = vmatpush1.msra.mxu0 0.0
    %549 = vmatprep.subr.mxu0 0.0
    %550 = vmatpush1.msra.mxu0 0.0
    %551 = vmatprep.subr.mxu0 0.0
    %552 = vmatpush1.msra.mxu0 0.0
    %553 = vmatprep.subr.mxu0 0.0
    %554 = vmatpush1.msra.mxu0 0.0
    %555 = vmatprep.subr.mxu0 0.0
    %556 = vmatpush1.msra.mxu0 0.0
    %557 = vmatprep.subr.mxu0 0.0
    %558 = vmatpush1.msra.mxu0 0.0
    %559 = vmatprep.subr.mxu0 0.0
    %560 = vmatpush1.msra.mxu0 0.0
    %561 = vmatprep.subr.mxu0 0.0
    %562 = vmatpush1.msra.mxu0 0.0
    %563 = vmatprep.subr.mxu0 0.0
    %564 = vmatpush1.msra.mxu0 0.0
    %565 = vmatprep.subr.mxu0 0.0
    %566 = vmatpush1.msra.mxu0 0.0
    %567 = vmatprep.subr.mxu0 0.0
    %568 = vmatpush1.msra.mxu0 0.0
    %569 = vmatprep.subr.mxu0 0.0
    %570 = vmatpush1.msra.mxu0 0.0
    %571 = vmatprep.subr.mxu0 0.0
    %572 = vmatpush1.msra.mxu0 0.0
    %573 = vmatprep.subr.mxu0 0.0
    %574 = vmatpush1.msra.mxu0 0.0
    %575 = vmatprep.subr.mxu0 0.0
    %576 = vmatpush1.msra.mxu0 0.0
    %577 = vmatprep.subr.mxu0 0.0
    %578 = vmatpush1.msra.mxu0 0.0
    %579 = vmatprep.subr.mxu0 0.0
    %580 = vmatpush1.msra.mxu0 0.0
    %581 = vmatprep.subr.mxu0 0.0
    %582 = vmatpush1.msra.mxu0 0.0
    %583 = vmatprep.subr.mxu0 0.0
    %584 = vmatpush1.msra.mxu0 0.0
    %585 = vmatprep.subr.mxu0 0.0
    %586 = vmatpush1.msra.mxu0 0.0
    %587 = vmatprep.subr.mxu0 0.0
    %588 = vmatpush1.msra.mxu0 0.0
    %589 = vmatprep.subr.mxu0 0.0
    %590 = vmatpush1.msra.mxu0 0.0
    %591 = vmatprep.subr.mxu0 0.0
    %592 = vmatpush1.msra.mxu0 0.0
    %593 = vmatprep.subr.mxu0 0.0
    %594 = vmatpush1.msra.mxu0 0.0
    %595 = vmatprep.subr.mxu0 0.0
    %596 = vmatpush1.msra.mxu0 0.0
    %597 = vmatprep.subr.mxu0 0.0
    %598 = vmatpush1.msra.mxu0 0.0
    %599 = vmatprep.subr.mxu0 0.0
    %600 = vmatpush1.msra.mxu0 0.0
    %601 = vmatprep.subr.mxu0 0.0
    %602 = vmatpush1.msra.mxu0 0.0
    %603 = vmatprep.subr.mxu0 0.0
    %604 = vmatpush1.msra.mxu0 0.0
    %605 = vmatprep.mubr.f32.mxu0 0.0
    %606 = vmatmul.mubr.f32.gmra.mrb[0].mxu0 %v536
    %v607 = vpop.f32.mrb[0].mxu0
    %v608 = vadd.f32 0.0, %v607
    %v609 = vpop.f32.mrb[0].mxu0
    %610 = vmatprep.mubr.f32.mxu0 0.0
    %611 = vmatmul.mubr.f32.gmra.mrb[0].mxu0 %v539
    %v612 = vpop.f32.mrb[0].mxu0
    %v613 = vadd.f32 0.0, %v612
    %v614 = vpop.f32.mrb[0].mxu0
    %615 = vdwg.mxu0
    %v616 = vadd.f32 %v519, %v608
    %v617 = vadd.f32 %v524, %v613
    %v618 = vld [vmem:[%s2] sm:$0xff]
    %v619 = vld [vmem:[%s2 + $0x8] sm:$0xff]
    %621 = vset.pattern.permute.xlu0 0
    %622 = vperm.xlu0 %621, %v618
    %v623 = vpop.permute.xlu0 %622
    %626 = vset.pattern.permute.xlu0 0
    %627 = vperm.xlu0 %626, %v619
    %v628 = vpop.permute.xlu0 %627
    %v630 = vadd.f32 %v616, %v623
    %v631 = vadd.f32 %v617, %v628
    %v632 = vxor.u32 %v631, 2147483648
    %v633 = vmul.f32 %v632, 1.442695
    %v634 = vpow.pop %v633
    %v635 = vadd.f32 %v634, 1.0
    %v636 = vrcp.pop %v635
    %v637 = vmul.f32 1.0, %v636
    %v638 = vmul.f32 %v630, %v637
    %s639 = scalar_lea.vmem [#allocation5], 8
    %640 = vst [vmem:[%s639] sm:$0xff] %v638
    %v641 = vld [vmem:[#allocation2] sm:$0xff]
    %v642 = vld [vmem:[#allocation2 + $0x8] sm:$0xff]
    %644 = vrot.lane.b32.xlu0 %v638, 2
    %v645 = vpop.permute.xlu0 %644
    %v647 = vadd.f32 %v641, %v645
    %v648 = vadd.f32 %v642, %v645
    %651 = vrot.lane.b32.xlu0 %v647, 126
    %v652 = vpop.permute.xlu0 %651
    %653 = vrot.lane.b32.xlu0 %v648, 126
    %v654 = vpop.permute.xlu0 %653
    %v655 = vsel %vm46, %v652, %v654
    %s657 = scalar_lea.vmem [#allocation3], 8
    %658 = vst [vmem:[%s657] sm:$0xff] %v655
    // Predicated region
    $region14: #{tpu_custom_call.1} parent=1 // pred_check
      _
    $region15: #{tpu_custom_call.1} parent=1 // pred_check_branch
      %660 = sbr.rel (0) target = $region17
    $region16: #{tpu_custom_call.1} parent=1 // pred_region
      %s662 = ssub.s32 256, 256
      %663 = vsyncadd [#allocation4], %s662
      %s664 = sshll.u32 [#allocation3], 4
      %s665 = int_to_ptr.vmem [resolvable:$true] %s664
      %670 = dma.vmem_to_hbm [thread:$0]  %s665, 256, %s3, [#allocation4], 128, 128, 8
    $region17: #{tpu_custom_call.1} parent=1 // pred_fallthru
      _
    // Predicated region
    $region18: #{tpu_custom_call.1} parent=1 // pred_check
      _
    $region19: #{tpu_custom_call.1} parent=1 // pred_check_branch
      %672 = sbr.rel (0) target = $region21
    $region20: #{tpu_custom_call.1} parent=1 // pred_region
      %s674 = ssub.s32 256, 256
      %675 = vsyncadd [#allocation6], %s674
      %s676 = sshll.u32 [#allocation5], 4
      %s677 = int_to_ptr.vmem [resolvable:$true] %s676
      %682 = dma.vmem_to_hbm [thread:$0]  %s677, 256, %s4, [#allocation6], 128, 128, 8
    $region21: #{tpu_custom_call.1} parent=1 // pred_fallthru
      _
    // Predicated region
    $region22: #{tpu_custom_call.1} parent=1 // pred_check
      _
    $region23: #{tpu_custom_call.1} parent=1 // pred_check_branch
      %684 = sbr.rel (0) target = $region25
    $region24: #{tpu_custom_call.1} parent=1 // pred_region
      %685 = dma.done [#allocation4], 256
    $region25: #{tpu_custom_call.1} parent=1 // pred_fallthru
      _
    // Predicated region
    $region26: #{tpu_custom_call.1} parent=1 // pred_check
      _
    $region27: #{tpu_custom_call.1} parent=1 // pred_check_branch
      %687 = sbr.rel (0) target = $region29
    $region28: #{tpu_custom_call.1} parent=1 // pred_region
      %688 = dma.done [#allocation6], 256
    $region29: #{tpu_custom_call.1} parent=1 // pred_fallthru
      _
    %689 = vsyncpa [#allocation4], 1
    %690 = vsyncpa [#allocation6], 1

</llo_original>
